<compile_context>
chip_gen: v6e
topology: v6e:2x2x1
jax: 0.10.0
libtpu: 0.0.40
codegen_flags: <defaults>
</compile_context>

<pallas_src>
import jax
import jax.numpy as jnp
from jax.experimental import pallas as pl
from jax.experimental.pallas import tpu as pltpu


def _round_up(x, m):
    return (x + m - 1) // m * m


def _gather_slab_kernel(idx_ref, w_ref, out_ref):
    # idx_ref: (TILE_N, 1) int32, w_ref: (V, D), out_ref: (TILE_N, D)
    tile_n = idx_ref.shape[0]
    v = w_ref.shape[0]
    idx = idx_ref[...]                                          # (TILE_N, 1)
    col = jax.lax.broadcasted_iota(jnp.int32, (tile_n, v), 1)   # (TILE_N, V)
    one_hot = (col == idx).astype(w_ref.dtype)                  # exact 0/1
    out_ref[...] = jnp.dot(
        one_hot, w_ref[...], preferred_element_type=jnp.float32
    ).astype(out_ref.dtype)


def field_embedding(x, weight, offsets, *, tile_n=512):
    """x: (B, F) int; weight: (V, D) float; offsets: (F,) int -> (B, F, D)."""
    B, F = x.shape
    V, D = weight.shape
    n = B * F

    # Precompute (and clamp, for OOB safety) the gathered row indices.
    idx = (x.astype(jnp.int32) + offsets.astype(jnp.int32)[None, :]).reshape(-1)
    idx = jnp.clip(idx, 0, V - 1)

    # Sublane-dense slabs: TILE_N a multiple of 8; pad n up to a tile boundary.
    tile_n = min(tile_n, _round_up(n, 8))
    n_pad = _round_up(n, tile_n)
    idx_pad = jnp.pad(idx, (0, n_pad - n))[:, None]             # (n_pad, 1)

    # Table-resident-in-VMEM path, sized against the v7x 64 MiB VMEM budget.
    # Factor 2 accounts for the default double buffering of every BlockSpec.
    itemsize = jnp.dtype(weight.dtype).itemsize
    vmem_need = 2 * (V * D * itemsize + tile_n * D * itemsize + tile_n * 4)
    if vmem_need > (48 << 20):
        # TODO(synk): add a manually double-buffered per-row DMA gather path
        # (weight in pl.ANY + make_async_copy) for tables too large for VMEM.
        raise ValueError("embedding table too large for VMEM-resident gather")
    vmem_limit = int(min(max(2 * vmem_need + (4 << 20), 16 << 20), 48 << 20))

    grid = (n_pad // tile_n,)
    cost = pl.CostEstimate(
        flops=2 * n_pad * V * D,
        transcendentals=0,
        bytes_accessed=n_pad * D * itemsize + V * D * itemsize + n_pad * 4,
    )

    out_flat = pl.pallas_call(
        _gather_slab_kernel,
        out_shape=jax.ShapeDtypeStruct((n_pad, D), weight.dtype),
        grid=grid,
        in_specs=[
            pl.BlockSpec((tile_n, 1), lambda i: (i, 0)),  # per-slab indices
            pl.BlockSpec((V, D), lambda i: (0, 0)),       # whole table, resident
        ],
        out_specs=pl.BlockSpec((tile_n, D), lambda i: (i, 0)),
        compiler_params=pltpu.CompilerParams(
            dimension_semantics=("parallel",),
            vmem_limit_bytes=vmem_limit,
        ),
        cost_estimate=cost,
    )(idx_pad, weight)

    return out_flat[:n].reshape(B, F, D)


def _reference(x, weight, offsets):
    B, F = x.shape
    D = weight.shape[1]
    return weight[(x + offsets[None, :]).reshape(-1)].reshape(B, F, D)


if __name__ == "__main__":
    key = jax.random.PRNGKey(0)

    # ---- Primary (module-sized) test: batch=2, num_fields=4, dim=128 ----
    field_dims = (3, 5, 7, 9)                 # num_fields = 4, vocab = 24
    embedding_dim = 128
    batch = 2
    num_fields = len(field_dims)
    vocab = sum(field_dims)

    k_w, k_x, k_w2, k_x2 = jax.random.split(key, 4)

    # nn.Embedding weight: (sum(field_dims), embedding_dim), float32
    weight = jax.random.normal(k_w, (vocab, embedding_dim), dtype=jnp.float32)

    # offsets buffer: [0, *accumulate(field_dims)][:-1]
    offsets = jnp.array(
        [0] + list(jnp.cumsum(jnp.array(field_dims)))[:-1], dtype=jnp.int32
    )

    # x: (batch, num_fields), each column bounded by its field's cardinality
    maxvals = jnp.array(field_dims, dtype=jnp.int32)
    u = jax.random.uniform(k_x, (batch, num_fields))
    x = (u * maxvals[None, :]).astype(jnp.int32)      # in [0, field_dims[f])

    out = field_embedding(x, weight, offsets)
    out = jax.block_until_ready(out)

    ref = _reference(x, weight, offsets)
    assert out.shape == (batch, num_fields, embedding_dim)
    assert jnp.allclose(out, ref), "mismatch vs reference gather (small case)"

    # ---- Secondary test exercising multiple grid steps (tiled path) ----
    field_dims2 = (31, 17, 64, 50, 38)        # vocab = 200
    batch2, num_fields2, dim2 = 64, len(field_dims2), 128
    vocab2 = sum(field_dims2)

    weight2 = jax.random.normal(k_w2, (vocab2, dim2), dtype=jnp.float32)
    offsets2 = jnp.array(
        [0] + list(jnp.cumsum(jnp.array(field_dims2)))[:-1], dtype=jnp.int32
    )
    maxvals2 = jnp.array(field_dims2, dtype=jnp.int32)
    u2 = jax.random.uniform(k_x2, (batch2, num_fields2))
    x2 = (u2 * maxvals2[None, :]).astype(jnp.int32)

    out2 = field_embedding(x2, weight2, offsets2, tile_n=128)  # grid of 3 steps
    out2 = jax.block_until_ready(out2)
    ref2 = _reference(x2, weight2, offsets2)
    assert out2.shape == (batch2, num_fields2, dim2)
    assert jnp.allclose(out2, ref2), "mismatch vs reference gather (tiled case)"

    print("KERNEL_OK")
</pallas_src>

<mosaic_0001>
module attributes {stable_mosaic.version = 11 : i64} {
  func.func @_gather_slab_kernel(%arg0: i32, %arg1: memref<8x1xi32, #tpu.memory_space<vmem>>, %arg2: memref<24x128xf32, #tpu.memory_space<vmem>>, %arg3: memref<8x128xf32, #tpu.memory_space<vmem>>) attributes {dimension_semantics = [#tpu.dimension_semantics<parallel>], iteration_bounds = array<i64: 1>, scalar_prefetch = 0 : i64, scratch_operands = 0 : i64, tpu.core_type = #tpu.core_type<tc>, window_params = [{transform_indices = @transform_0, window_bounds = array<i64: 8, 1>}, {pipeline_mode = #tpu.pipeline_mode<synchronous>, transform_indices = @transform_1, window_bounds = array<i64: 24, 128>}, {transform_indices = @transform_2, window_bounds = array<i64: 8, 128>}]} {
    %c0 = arith.constant 0 : index
    %c0_0 = arith.constant 0 : index
    %0 = vector.load %arg1[%c0, %c0_0] : memref<8x1xi32, #tpu.memory_space<vmem>>, vector<8x1xi32>
    %1 = tpu.iota {dimensions = array<i32: 1>} : vector<8x24xi32>
    %2 = vector.broadcast %0 : vector<8x1xi32> to vector<8x24xi32>
    %3 = arith.cmpi eq, %1, %2 : vector<8x24xi32>
    %4 = arith.extui %3 : vector<8x24xi1> to vector<8x24xi32>
    %5 = arith.sitofp %4 : vector<8x24xi32> to vector<8x24xf32>
    %c0_1 = arith.constant 0 : index
    %c0_2 = arith.constant 0 : index
    %6 = vector.load %arg2[%c0_1, %c0_2] : memref<24x128xf32, #tpu.memory_space<vmem>>, vector<24x128xf32>
    %cst = arith.constant dense<0.000000e+00> : vector<8x128xf32>
    %7 = tpu.matmul %5, %6, %cst {dimension_numbers = #tpu.dot_dimension_numbers<[1], [0], [0], [1], [0, 0, 1, 1], [], []>} : vector<8x24xf32>, vector<24x128xf32>, vector<8x128xf32> -> vector<8x128xf32>
    %c0_3 = arith.constant 0 : index
    %c0_4 = arith.constant 0 : index
    %8 = vector.load %arg3[%c0_3, %c0_4] : memref<8x128xf32, #tpu.memory_space<vmem>>, vector<8x128xf32>
    tpu.vector_store %arg3[%c0_3, %c0_4], %7 {strides = array<i32>} : memref<8x128xf32, #tpu.memory_space<vmem>>, vector<8x128xf32>,
    return
  }
  func.func @transform_0(%arg0: i32) -> (i32, i32) {
    %c0_i32 = arith.constant 0 : i32
    %c0_i32_0 = arith.constant 0 : i32
    return %arg0, %c0_i32 : i32, i32
  }
  func.func @transform_1(%arg0: i32) -> (i32, i32) {
    %c0_i32 = arith.constant 0 : i32
    %c0_i32_0 = arith.constant 0 : i32
    %c0_i32_1 = arith.constant 0 : i32
    return %c0_i32, %c0_i32_0 : i32, i32
  }
  func.func @transform_2(%arg0: i32) -> (i32, i32) {
    %c0_i32 = arith.constant 0 : i32
    %c0_i32_0 = arith.constant 0 : i32
    return %arg0, %c0_i32 : i32, i32
  }
}

</mosaic_0001>

<llo_original>
// kernel: tpu_custom_call.1
$region0: #{tpu_custom_call.1}
  #allocation0 [shape = 'u32[]', space=smem, size = 0x4, offset = 0x4, fixed_abs, tag = 'smem constant byte address 0x4 - core index']
  #allocation1 [shape = 'u32[144,128]{1,0:T(1,128)}', space=vmem, size = 0x12000, scoped, tag = 'internal scratch']
  %s0 = inlined_call_operand.vmem [shape: s32[8,1], index: 0, kind: input, shape index: {}]
  %s1 = inlined_call_operand.hbm [shape: f32[24,128], index: 1, kind: input, shape index: {}]
  %s2 = inlined_call_operand.hbm [shape: f32[8,128], index: 2, kind: output, shape index: {}]
  %s3 = sld [smem:[#allocation0]]
  $region22: #{tpu_custom_call.1} parent=0
    _
  %s5 = ssub.s32 1, %s3
  %s6 = scalar_select 0, %s5, %s3
  $region1: #{tpu_custom_call.1} parent=0
    #allocation2 [shape = 'u8[12288]{0}', space=vmem, size = 0x3000, scoped, tag = 'input window, operand 1, single buffered']
    #allocation3 [shape = 's32[1]{0}', space=sflag, size = 0x4, scoped, tag = 'scoped memory for tpu_custom_call.1']
    #allocation4 [shape = 's32[1]{0}', space=sflag, size = 0x4, scoped, tag = 'scoped memory for tpu_custom_call.1']
    #allocation5 [shape = 'u8[4096]{0}', space=vmem, size = 0x1000, scoped, tag = 'output window, operand 0, single buffered']
    %7 = vsyncpa [#allocation3], 0
    %8 = vsyncpa [#allocation4], 0
    // Predicated region
    $region2: #{tpu_custom_call.1} parent=1 // pred_check
      _
    $region3: #{tpu_custom_call.1} parent=1 // pred_check_branch
      %10 = sbr.rel (0) target = $region5
    $region4: #{tpu_custom_call.1} parent=1 // pred_region
      _
    $region5: #{tpu_custom_call.1} parent=1 // pred_fallthru
      _
    // Predicated region
    $region6: #{tpu_custom_call.1} parent=1 // pred_check
      _
    $region7: #{tpu_custom_call.1} parent=1 // pred_check_branch
      %12 = sbr.rel (0) target = $region9
    $region8: #{tpu_custom_call.1} parent=1 // pred_region
      %s14 = ssub.s32 384, 384
      %15 = vsyncadd [#allocation3], %s14
      %s16 = sshll.u32 [#allocation2], 4
      %s17 = int_to_ptr.vmem [resolvable:$true] %s16
      %22 = dma.hbm_to_vmem [thread:$0]  %s1, 384, %s17, [#allocation3], 128, 128, 8
    $region9: #{tpu_custom_call.1} parent=1 // pred_fallthru
      _
    // Predicated region
    $region10: #{tpu_custom_call.1} parent=1 // pred_check
      _
    $region11: #{tpu_custom_call.1} parent=1 // pred_check_branch
      %24 = sbr.rel (0) target = $region13
    $region12: #{tpu_custom_call.1} parent=1 // pred_region
      %25 = dma.done [#allocation3], 384
    $region13: #{tpu_custom_call.1} parent=1 // pred_fallthru
      _
    %v26 = vld [vmem:[%s0] sm:$0xff]
    %v27 = vlaneseq
    %v28 = vand.u32 %v27, 127
    %29 = vset.pattern.permute.xlu0 0
    %30 = vperm.xlu0 %29, %v26
    %v31 = vpop.permute.xlu0 %30
    %vm32 = vcmp.eq.s32.totalorder %v28, %v31
    %v33 = vsel %vm32, 1, 0
    %v34 = vcvt.s32.f32 %v33
    %v35 = vld [vmem:[#allocation2] sm:$0xff]
    %v36 = vld [vmem:[#allocation2 + $0x8] sm:$0xff]
    %v37 = vld [vmem:[#allocation2 + $0x10] sm:$0xff]
    %vm38 = vcmask 195584
    %v40 = vsel %vm38, %v34, 0
    %42 = vmatprep.subr.mxu0 0.0
    %43 = vmatpush1.msra.mxu0 0.0
    %44 = vmatprep.subr.mxu0 0.0
    %45 = vmatpush1.msra.mxu0 0.0
    %46 = vmatprep.subr.mxu0 0.0
    %47 = vmatpush1.msra.mxu0 0.0
    %48 = vmatprep.subr.mxu0 0.0
    %49 = vmatpush1.msra.mxu0 0.0
    %50 = vmatprep.subr.mxu0 0.0
    %51 = vmatpush1.msra.mxu0 0.0
    %52 = vmatprep.subr.mxu0 0.0
    %53 = vmatpush1.msra.mxu0 0.0
    %54 = vmatprep.subr.mxu0 0.0
    %55 = vmatpush1.msra.mxu0 0.0
    %56 = vmatprep.subr.mxu0 0.0
    %57 = vmatpush1.msra.mxu0 0.0
    %58 = vmatprep.subr.mxu0 0.0
    %59 = vmatpush1.msra.mxu0 0.0
    %60 = vmatprep.subr.mxu0 0.0
    %61 = vmatpush1.msra.mxu0 0.0
    %62 = vmatprep.subr.mxu0 0.0
    %63 = vmatpush1.msra.mxu0 0.0
    %64 = vmatprep.subr.mxu0 0.0
    %65 = vmatpush1.msra.mxu0 0.0
    %66 = vmatprep.subr.mxu0 0.0
    %67 = vmatpush1.msra.mxu0 0.0
    %68 = vmatprep.subr.mxu0 0.0
    %69 = vmatpush1.msra.mxu0 %v37
    %70 = vmatprep.subr.mxu0 0.0
    %71 = vmatpush1.msra.mxu0 %v36
    %72 = vmatprep.subr.mxu0 0.0
    %73 = vmatpush1.msra.mxu0 %v35
    %74 = vmatprep.subr.mxu0 0.0
    %75 = vmatpush2.msra.mxu0 0.0
    %76 = vmatprep.subr.mxu0 0.0
    %77 = vmatpush2.msra.mxu0 0.0
    %78 = vmatprep.subr.mxu0 0.0
    %79 = vmatpush2.msra.mxu0 0.0
    %80 = vmatprep.subr.mxu0 0.0
    %81 = vmatpush2.msra.mxu0 0.0
    %82 = vmatprep.subr.mxu0 0.0
    %83 = vmatpush2.msra.mxu0 0.0
    %84 = vmatprep.subr.mxu0 0.0
    %85 = vmatpush2.msra.mxu0 0.0
    %86 = vmatprep.subr.mxu0 0.0
    %87 = vmatpush2.msra.mxu0 0.0
    %88 = vmatprep.subr.mxu0 0.0
    %89 = vmatpush2.msra.mxu0 0.0
    %90 = vmatprep.subr.mxu0 0.0
    %91 = vmatpush2.msra.mxu0 0.0
    %92 = vmatprep.subr.mxu0 0.0
    %93 = vmatpush2.msra.mxu0 0.0
    %94 = vmatprep.subr.mxu0 0.0
    %95 = vmatpush2.msra.mxu0 0.0
    %96 = vmatprep.subr.mxu0 0.0
    %97 = vmatpush2.msra.mxu0 0.0
    %98 = vmatprep.subr.mxu0 0.0
    %99 = vmatpush2.msra.mxu0 0.0
    %100 = vmatprep.subr.mxu0 0.0
    %101 = vmatpush2.msra.mxu0 0.0
    %102 = vmatprep.subr.mxu0 0.0
    %103 = vmatpush2.msra.mxu0 0.0
    %104 = vmatprep.subr.mxu0 0.0
    %105 = vmatpush2.msra.mxu0 0.0
    %106 = vmatprep.mubr.f32.mxu0 0.0
    %107 = vmatmul.mubr.f32.gmra.mxu0 %v40
    %v108 = vpop.f32.mrf.mxu0
    %v109 = vadd.f32 0.0, %v108
    %v110 = vpop.f32.mrf.mxu0
    %111 = vdwg.mxu0
    %112 = vst [vmem:[#allocation5] sm:$0xff] %v109
    // Predicated region
    $region14: #{tpu_custom_call.1} parent=1 // pred_check
      _
    $region15: #{tpu_custom_call.1} parent=1 // pred_check_branch
      %114 = sbr.rel (0) target = $region17
    $region16: #{tpu_custom_call.1} parent=1 // pred_region
      %s116 = ssub.s32 128, 128
      %117 = vsyncadd [#allocation4], %s116
      %s119 = sshll.u32 [#allocation5], 4
      %s120 = int_to_ptr.vmem [resolvable:$true] %s119
      %122 = dma.vmem_to_hbm [thread:$0]  %s120, 128, %s2, [#allocation4]
    $region17: #{tpu_custom_call.1} parent=1 // pred_fallthru
      _
    // Predicated region
    $region18: #{tpu_custom_call.1} parent=1 // pred_check
      _
    $region19: #{tpu_custom_call.1} parent=1 // pred_check_branch
      %124 = sbr.rel (0) target = $region21
    $region20: #{tpu_custom_call.1} parent=1 // pred_region
      %125 = dma.done [#allocation4], 128
    $region21: #{tpu_custom_call.1} parent=1 // pred_fallthru
      _
    %126 = vsyncpa [#allocation3], 1
    %127 = vsyncpa [#allocation4], 1

</llo_original>
